<compile_context>
chip_gen: v6e
topology: v6e:2x2x1
jax: 0.10.0
libtpu: 0.0.40
codegen_flags: <defaults>
</compile_context>

<pallas_src>
import functools

import jax
import jax.numpy as jnp
from jax.experimental import pallas as pl
from jax.experimental.pallas import tpu as pltpu

LANE = 128


def _round_up(n, m):
    return ((n + m - 1) // m) * m


def _pick_row_tile(B):
    """Row tile + grid size. >= 2 steps (ideally 4) once B >= 16, bt <= 128."""
    if B < 16:
        return B, 1                       # tiny batch: nothing to pipeline
    bt = min(128, _round_up(pl.cdiv(B, 4), 8))
    bt = min(bt, _round_up(pl.cdiv(B, 2), 8))   # guarantee >= 2 grid steps
    nb = pl.cdiv(B, bt)                   # trailing partial block is tolerated
    return bt, nb


def _vmem_limit(bytes_per_step, weight_bytes):
    need = 3 * bytes_per_step + weight_bytes + (1 << 20)
    return int(min(64 * 2**20, max(32 * 2**20, need)))


# ----------------------------------------------------------------------------
# Kernel 1 (eval branch, fused):
#   att_score = attentions[-1].mean(heads)[:, 0, :]     (CLS row, heads-major)
#   logits    = pooler @ W_cls + b_cls                  (class dim lane-padded)
#   nll_i     = logsumexp(logits_i[:C]) - logits_i[y_i] (packed into lane C)
# ----------------------------------------------------------------------------
def _eval_fused_kernel(num_classes, compute_dtype,
                       attn_ref, x_ref, w_ref, b_ref, lab_ref,
                       score_ref, logits_ref):
    # Head-mean of the CLS-query attention row: sum over the untiled leading
    # head dim (cheap VPU adds, no XLU sublane reduce).
    n_heads = attn_ref.shape[0]
    score_ref[...] = jnp.sum(attn_ref[...].astype(jnp.float32), axis=0) * \
        jnp.float32(1.0 / n_heads)

    # Classifier GEMM on the MXU (lane-dense N = padded class dim).
    x = x_ref[...].astype(compute_dtype)
    logits = jnp.dot(x, w_ref[...], preferred_element_type=jnp.float32)
    logits = logits + b_ref[...]

    # Cross-entropy in f32: padded classes masked out of the LSE; target row
    # picked via iota == label (out-of-range labels give nll == lse; inputs
    # are trusted here).
    rows, cp = logits.shape
    class_ids = jax.lax.broadcasted_iota(jnp.int32, (rows, cp), 1)
    masked = jnp.where(class_ids < num_classes, logits, jnp.float32(-1e30))
    m = jnp.max(masked, axis=-1, keepdims=True)
    lse = m + jnp.log(jnp.sum(jnp.exp(masked - m), axis=-1, keepdims=True))
    onehot = (class_ids == lab_ref[...]).astype(jnp.float32)
    tgt = jnp.sum(onehot * logits, axis=-1, keepdims=True)
    nll = lse - tgt

    # Pack the per-row NLL into the spare padded lane `num_classes` so the
    # store stays a single lane-dense vst (no extra narrow output stream).
    logits_ref[...] = jnp.where(class_ids == num_classes, nll, logits)


def forward_eval(params, attn_last, pooler_output, labels, num_classes):
    """Eval branch of ContrastiveLearningWithDataAugmentation.forward."""
    B, nH, L, _ = attn_last.shape
    H = pooler_output.shape[1]

    # CLS-query row only, heads leading (no nH sublane padding, VPU head-sum).
    # TODO(synk): for very large B*L this slab could instead be sliced
    # directly from attn_last via a (bt, nH, 1, L) BlockSpec.
    attn_cls = jnp.transpose(attn_last[:, :, 0, :], (1, 0, 2))    # (nH, B, L)

    cp = _round_up(num_classes + 1, LANE)      # +1 spare lane packs per-row NLL
    compute_dtype = jnp.bfloat16 if H >= 128 else jnp.float32
    w_pad = jnp.zeros((H, cp), jnp.float32).at[:, :num_classes].set(
        params["cls_w"]).astype(compute_dtype)
    b_pad = jnp.zeros((1, cp), jnp.float32).at[:, :num_classes].set(
        params["cls_b"].reshape(1, -1))
    lab2d = labels.astype(jnp.int32).reshape(B, 1)

    bt, nb = _pick_row_tile(B)

    blk_bytes = 4 * (nH * bt * L + bt * H + bt * LANE + bt * L + bt * cp)
    wgt_bytes = 2 * (w_pad.dtype.itemsize * H * cp + 4 * cp)
    # NOTE: on v7x the grid-invariant weight specs could additionally use
    # pipeline_mode=pl.Buffered(1) to halve their VMEM footprint.

    kern = functools.partial(_eval_fused_kernel, num_classes, compute_dtype)
    score, logits_p = pl.pallas_call(
        kern,
        grid=(nb,),
        in_specs=[
            pl.BlockSpec((nH, bt, L), lambda i: (0, i, 0)),       # CLS attn rows
            pl.BlockSpec((bt, H), lambda i: (i, 0)),              # pooler_output
            pl.BlockSpec((H, cp), lambda i: (0, 0)),              # W_cls (padded)
            pl.BlockSpec((1, cp), lambda i: (0, 0)),              # b_cls (padded)
            pl.BlockSpec((bt, 1), lambda i: (i, 0)),              # int32 labels
        ],
        out_specs=(
            pl.BlockSpec((bt, L), lambda i: (i, 0)),              # att_score
            pl.BlockSpec((bt, cp), lambda i: (i, 0)),             # logits + NLL
        ),
        out_shape=(
            jax.ShapeDtypeStruct((B, L), jnp.float32),
            jax.ShapeDtypeStruct((B, cp), jnp.float32),
        ),
        compiler_params=pltpu.CompilerParams(
            dimension_semantics=("parallel",),
            vmem_limit_bytes=_vmem_limit(blk_bytes, wgt_bytes)),
    )(attn_cls, pooler_output, w_pad, b_pad, lab2d)

    nll = logits_p[:, num_classes]             # packed per-row NLL
    return {
        "loss": jnp.mean(nll),
        "logits": logits_p[:, :num_classes],
        "last_hidden_states": pooler_output,
        "attention_score": score,
    }


# ----------------------------------------------------------------------------
# Kernel 2 (training-augmentation branch, fused, grid = (rows, bag_size)):
#   * classifier on every enhanced sample + per-row CE vs labels
#     (mean over S*B == mean over steps of per-step batch-mean CE)
#   * SimilaritySelection: cos(enh[s,b], og[b]) weighting, mean over steps,
#     mapping Linear.  (Reference divides by S only, not by the weight sum.)
# ----------------------------------------------------------------------------
def _aug_fused_kernel(num_classes, S, compute_dtype,
                      enh_ref, og_ref, cls_w_ref, cls_b_ref,
                      map_w_ref, map_b_ref, lab_ref,
                      enh_logits_ref, weighted_ref):
    s = pl.program_id(1)
    enh = enh_ref[...].astype(jnp.float32)                        # (bt, H)

    # Classifier logits for augmentation step s (MXU, lane-dense N = cp).
    logits = jnp.dot(enh.astype(compute_dtype), cls_w_ref[...],
                     preferred_element_type=jnp.float32) + cls_b_ref[...]

    # Per-row cross-entropy (padded classes masked out of the f32 LSE).
    rows, cp = logits.shape
    class_ids = jax.lax.broadcasted_iota(jnp.int32, (rows, cp), 1)
    masked = jnp.where(class_ids < num_classes, logits, jnp.float32(-1e30))
    m = jnp.max(masked, axis=-1, keepdims=True)
    lse = m + jnp.log(jnp.sum(jnp.exp(masked - m), axis=-1, keepdims=True))
    onehot = (class_ids == lab_ref[...]).astype(jnp.float32)
    tgt = jnp.sum(onehot * logits, axis=-1, keepdims=True)
    nll = lse - tgt
    enh_logits_ref[...] = jnp.where(class_ids == num_classes, nll, logits)

    # Cosine-similarity weight against the original pooled sample; rsqrt runs
    # on the EUP slot, keeping the VALU free for the f32 elementwise math.
    og = og_ref[...].astype(jnp.float32)                          # (bt, H)
    e2 = jnp.sum(enh * enh, axis=-1, keepdims=True)
    o2 = jnp.sum(og * og, axis=-1, keepdims=True)
    dots = jnp.sum(enh * og, axis=-1, keepdims=True)
    cos = dots * jax.lax.rsqrt(e2 * o2 + jnp.float32(1e-12))
    contrib = enh * cos

    # The weighted-rep output block is invariant over the trailing S axis, so
    # it stays VMEM-resident and doubles as the accumulator.
    @pl.when(s == 0)
    def _():
        weighted_ref[...] = jnp.zeros_like(weighted_ref)

    weighted_ref[...] += contrib

    @pl.when(s == S - 1)
    def _():
        w_mean = weighted_ref[...] * jnp.float32(1.0 / S)         # mean over S
        weighted_ref[...] = (
            jnp.dot(w_mean.astype(compute_dtype), map_w_ref[...],
                    preferred_element_type=jnp.float32) + map_b_ref[...])


def bert_with_augmentation(params, pooler_output, enhanced_feats, labels,
                           num_classes):
    """Enhanced-samples CE loss + SimilaritySelection, one fused pallas_call."""
    S, B, H = enhanced_feats.shape

    cp = _round_up(num_classes + 1, LANE)
    compute_dtype = jnp.bfloat16 if H >= 128 else jnp.float32
    w_pad = jnp.zeros((H, cp), jnp.float32).at[:, :num_classes].set(
        params["cls_w"]).astype(compute_dtype)
    b_pad = jnp.zeros((1, cp), jnp.float32).at[:, :num_classes].set(
        params["cls_b"].reshape(1, -1))
    map_w = params["map_w"].astype(compute_dtype)
    map_b = params["map_b"].reshape(1, H).astype(jnp.float32)
    lab2d = labels.astype(jnp.int32).reshape(B, 1)

    bt, nb = _pick_row_tile(B)

    blk_bytes = 4 * (3 * bt * H + bt * LANE + bt * cp)
    wgt_bytes = 2 * (w_pad.dtype.itemsize * (H * cp + H * H) + 4 * (cp + H))

    kern = functools.partial(_aug_fused_kernel, num_classes, S, compute_dtype)
    enh_logits_p, weighted = pl.pallas_call(
        kern,
        grid=(nb, S),
        in_specs=[
            pl.BlockSpec((None, bt, H), lambda i, s: (s, i, 0)),  # enh feats[s]
            pl.BlockSpec((bt, H), lambda i, s: (i, 0)),           # og pooler
            pl.BlockSpec((H, cp), lambda i, s: (0, 0)),           # W_cls (padded)
            pl.BlockSpec((1, cp), lambda i, s: (0, 0)),           # b_cls (padded)
            pl.BlockSpec((H, H), lambda i, s: (0, 0)),            # W_map
            pl.BlockSpec((1, H), lambda i, s: (0, 0)),            # b_map
            pl.BlockSpec((bt, 1), lambda i, s: (i, 0)),           # int32 labels
        ],
        out_specs=(
            pl.BlockSpec((None, bt, cp), lambda i, s: (s, i, 0)), # logits + NLL
            pl.BlockSpec((bt, H), lambda i, s: (i, 0)),           # weighted rep
        ),
        out_shape=(
            jax.ShapeDtypeStruct((S, B, cp), jnp.float32),
            jax.ShapeDtypeStruct((B, H), jnp.float32),
        ),
        compiler_params=pltpu.CompilerParams(
            dimension_semantics=("parallel", "arbitrary"),
            vmem_limit_bytes=_vmem_limit(blk_bytes, wgt_bytes)),
    )(enhanced_feats, pooler_output, w_pad, b_pad, map_w, map_b, lab2d)

    enh_logits = enh_logits_p[:, :, :num_classes]
    enh_loss = jnp.mean(enh_logits_p[:, :, num_classes])  # == mean_s CE_s
    return enh_logits, enh_loss, weighted


# ----------------------------------------------------------------------------
# Main
# ----------------------------------------------------------------------------
def _run_once(B, H, L, NH, S, C, seed):
    key = jax.random.PRNGKey(seed)
    k = jax.random.split(key, 8)

    # Deterministic synthetic parameters (shapes from __init__; pre-transposed).
    params = {
        "cls_w": 0.1 * jax.random.normal(k[0], (H, C), jnp.float32),
        "cls_b": 0.1 * jax.random.normal(k[1], (C,), jnp.float32),
        "map_w": 0.1 * jax.random.normal(k[2], (H, H), jnp.float32),
        "map_b": 0.1 * jax.random.normal(k[3], (H,), jnp.float32),
    }

    # Synthetic stand-ins for the pretrained-model outputs.
    attn_logits = jax.random.normal(k[4], (B, NH, L, L), jnp.float32)
    attn_last = jax.nn.softmax(attn_logits, axis=-1)              # attentions[-1]
    pooler_output = jnp.tanh(jax.random.normal(k[5], (B, H), jnp.float32))
    enhanced_feats = jnp.tanh(jax.random.normal(k[6], (S, B, H), jnp.float32))
    labels = jax.random.randint(k[7], (B,), 0, C, jnp.int32)

    out_eval = forward_eval(params, attn_last, pooler_output, labels, C)
    enh_logits, enh_loss, weighted_rep = bert_with_augmentation(
        params, pooler_output, enhanced_feats, labels, C)
    return (out_eval["loss"], out_eval["logits"], out_eval["attention_score"],
            out_eval["last_hidden_states"], enh_logits, enh_loss, weighted_rep)


if __name__ == "__main__":
    # Small shapes consistent with the module's forward.
    res_small = _run_once(B=2, H=32, L=8, NH=4, S=3, C=4, seed=0)
    # Slightly larger batch to exercise the multi-step (pipelined / 2-TC) grid.
    res_multi = _run_once(B=32, H=32, L=8, NH=4, S=3, C=4, seed=0)

    jax.block_until_ready((res_small, res_multi))
    print("KERNEL_OK")
</pallas_src>

<mosaic_0001>
module attributes {stable_mosaic.version = 11 : i64} {
  func.func @_eval_fused_kernel(%arg0: i32, %arg1: memref<4x2x8xf32, #tpu.memory_space<vmem>>, %arg2: memref<2x32xf32, #tpu.memory_space<vmem>>, %arg3: memref<32x128xf32, #tpu.memory_space<vmem>>, %arg4: memref<1x128xf32, #tpu.memory_space<vmem>>, %arg5: memref<2x1xi32, #tpu.memory_space<vmem>>, %arg6: memref<2x8xf32, #tpu.memory_space<vmem>>, %arg7: memref<2x128xf32, #tpu.memory_space<vmem>>) attributes {dimension_semantics = [#tpu.dimension_semantics<parallel>], iteration_bounds = array<i64: 1>, scalar_prefetch = 0 : i64, scratch_operands = 0 : i64, tpu.core_type = #tpu.core_type<tc>, window_params = [{transform_indices = @transform_0, window_bounds = array<i64: 4, 2, 8>}, {transform_indices = @transform_1, window_bounds = array<i64: 2, 32>}, {pipeline_mode = #tpu.pipeline_mode<synchronous>, transform_indices = @transform_2, window_bounds = array<i64: 32, 128>}, {pipeline_mode = #tpu.pipeline_mode<synchronous>, transform_indices = @transform_3, window_bounds = array<i64: 1, 128>}, {transform_indices = @transform_4, window_bounds = array<i64: 2, 1>}, {transform_indices = @transform_5, window_bounds = array<i64: 2, 8>}, {transform_indices = @transform_6, window_bounds = array<i64: 2, 128>}]} {
    %c0 = arith.constant 0 : index
    %c0_0 = arith.constant 0 : index
    %c0_1 = arith.constant 0 : index
    %0 = vector.load %arg1[%c0, %c0_0, %c0_1] : memref<4x2x8xf32, #tpu.memory_space<vmem>>, vector<4x2x8xf32>
    %cst = arith.constant dense<0.000000e+00> : vector<2x8xf32>
    %1 = vector.multi_reduction <add>, %0, %cst [0] : vector<4x2x8xf32> to vector<2x8xf32>
    %cst_2 = arith.constant 2.500000e-01 : f32
    %2 = vector.broadcast %cst_2 : f32 to vector<2x8xf32>
    %3 = arith.mulf %1, %2 : vector<2x8xf32>
    %c0_3 = arith.constant 0 : index
    %c0_4 = arith.constant 0 : index
    %4 = vector.load %arg6[%c0_3, %c0_4] : memref<2x8xf32, #tpu.memory_space<vmem>>, vector<2x8xf32>
    tpu.vector_store %arg6[%c0_3, %c0_4], %3 {strides = array<i32>} : memref<2x8xf32, #tpu.memory_space<vmem>>, vector<2x8xf32>,
    %c0_5 = arith.constant 0 : index
    %c0_6 = arith.constant 0 : index
    %5 = vector.load %arg2[%c0_5, %c0_6] : memref<2x32xf32, #tpu.memory_space<vmem>>, vector<2x32xf32>
    %c0_7 = arith.constant 0 : index
    %c0_8 = arith.constant 0 : index
    %6 = vector.load %arg3[%c0_7, %c0_8] : memref<32x128xf32, #tpu.memory_space<vmem>>, vector<32x128xf32>
    %cst_9 = arith.constant dense<0.000000e+00> : vector<2x128xf32>
    %7 = tpu.matmul %5, %6, %cst_9 {dimension_numbers = #tpu.dot_dimension_numbers<[1], [0], [0], [1], [0, 0, 1, 1], [], []>} : vector<2x32xf32>, vector<32x128xf32>, vector<2x128xf32> -> vector<2x128xf32>
    %c0_10 = arith.constant 0 : index
    %c0_11 = arith.constant 0 : index
    %8 = vector.load %arg4[%c0_10, %c0_11] : memref<1x128xf32, #tpu.memory_space<vmem>>, vector<1x128xf32>
    %9 = vector.broadcast %8 : vector<1x128xf32> to vector<2x128xf32>
    %10 = arith.addf %7, %9 : vector<2x128xf32>
    %11 = tpu.iota {dimensions = array<i32: 1>} : vector<2x128xi32>
    %c4_i32 = arith.constant 4 : i32
    %12 = vector.broadcast %c4_i32 : i32 to vector<2x128xi32>
    %13 = arith.cmpi slt, %11, %12 : vector<2x128xi32>
    %cst_12 = arith.constant -1.000000e+30 : f32
    %14 = vector.broadcast %cst_12 : f32 to vector<2x128xf32>
    %15 = arith.select %13, %10, %14 : vector<2x128xi1>, vector<2x128xf32>
    %cst_13 = arith.constant dense<0xFF800000> : vector<2xf32>
    %16 = vector.multi_reduction <maximumf>, %15, %cst_13 [1] : vector<2x128xf32> to vector<2xf32>
    %17 = vector.shape_cast %16 : vector<2xf32> to vector<2x1xf32>
    %18 = vector.broadcast %17 : vector<2x1xf32> to vector<2x128xf32>
    %19 = arith.subf %15, %18 : vector<2x128xf32>
    %20 = math.exp %19 : vector<2x128xf32>
    %cst_14 = arith.constant dense<0.000000e+00> : vector<2xf32>
    %21 = vector.multi_reduction <add>, %20, %cst_14 [1] : vector<2x128xf32> to vector<2xf32>
    %22 = vector.shape_cast %21 : vector<2xf32> to vector<2x1xf32>
    %23 = math.log %22 : vector<2x1xf32>
    %24 = arith.addf %17, %23 : vector<2x1xf32>
    %c0_15 = arith.constant 0 : index
    %c0_16 = arith.constant 0 : index
    %25 = vector.load %arg5[%c0_15, %c0_16] : memref<2x1xi32, #tpu.memory_space<vmem>>, vector<2x1xi32>
    %26 = vector.broadcast %25 : vector<2x1xi32> to vector<2x128xi32>
    %27 = arith.cmpi eq, %11, %26 : vector<2x128xi32>
    %28 = arith.extui %27 : vector<2x128xi1> to vector<2x128xi32>
    %29 = arith.sitofp %28 : vector<2x128xi32> to vector<2x128xf32>
    %30 = arith.mulf %29, %10 : vector<2x128xf32>
    %cst_17 = arith.constant dense<0.000000e+00> : vector<2xf32>
    %31 = vector.multi_reduction <add>, %30, %cst_17 [1] : vector<2x128xf32> to vector<2xf32>
    %32 = vector.shape_cast %31 : vector<2xf32> to vector<2x1xf32>
    %33 = arith.subf %24, %32 : vector<2x1xf32>
    %c4_i32_18 = arith.constant 4 : i32
    %34 = vector.broadcast %c4_i32_18 : i32 to vector<2x128xi32>
    %35 = arith.cmpi eq, %11, %34 : vector<2x128xi32>
    %36 = vector.shape_cast %33 : vector<2x1xf32> to vector<2x1xf32>
    %37 = vector.broadcast %36 : vector<2x1xf32> to vector<2x128xf32>
    %38 = arith.select %35, %37, %10 : vector<2x128xi1>, vector<2x128xf32>
    %c0_19 = arith.constant 0 : index
    %c0_20 = arith.constant 0 : index
    %39 = vector.load %arg7[%c0_19, %c0_20] : memref<2x128xf32, #tpu.memory_space<vmem>>, vector<2x128xf32>
    tpu.vector_store %arg7[%c0_19, %c0_20], %38 {strides = array<i32>} : memref<2x128xf32, #tpu.memory_space<vmem>>, vector<2x128xf32>,
    return
  }
  func.func @transform_0(%arg0: i32) -> (i32, i32, i32) {
    %c0_i32 = arith.constant 0 : i32
    %c0_i32_0 = arith.constant 0 : i32
    %c0_i32_1 = arith.constant 0 : i32
    return %c0_i32, %arg0, %c0_i32_0 : i32, i32, i32
  }
  func.func @transform_1(%arg0: i32) -> (i32, i32) {
    %c0_i32 = arith.constant 0 : i32
    %c0_i32_0 = arith.constant 0 : i32
    return %arg0, %c0_i32 : i32, i32
  }
  func.func @transform_2(%arg0: i32) -> (i32, i32) {
    %c0_i32 = arith.constant 0 : i32
    %c0_i32_0 = arith.constant 0 : i32
    %c0_i32_1 = arith.constant 0 : i32
    return %c0_i32, %c0_i32_0 : i32, i32
  }
  func.func @transform_3(%arg0: i32) -> (i32, i32) {
    %c0_i32 = arith.constant 0 : i32
    %c0_i32_0 = arith.constant 0 : i32
    %c0_i32_1 = arith.constant 0 : i32
    return %c0_i32, %c0_i32_0 : i32, i32
  }
  func.func @transform_4(%arg0: i32) -> (i32, i32) {
    %c0_i32 = arith.constant 0 : i32
    %c0_i32_0 = arith.constant 0 : i32
    return %arg0, %c0_i32 : i32, i32
  }
  func.func @transform_5(%arg0: i32) -> (i32, i32) {
    %c0_i32 = arith.constant 0 : i32
    %c0_i32_0 = arith.constant 0 : i32
    return %arg0, %c0_i32 : i32, i32
  }
  func.func @transform_6(%arg0: i32) -> (i32, i32) {
    %c0_i32 = arith.constant 0 : i32
    %c0_i32_0 = arith.constant 0 : i32
    return %arg0, %c0_i32 : i32, i32
  }
}

</mosaic_0001>

<llo_original>
// kernel: tpu_custom_call.1
$region0: #{tpu_custom_call.1}
  #allocation0 [shape = 'u32[]', space=smem, size = 0x4, offset = 0x4, fixed_abs, tag = 'smem constant byte address 0x4 - core index']
  #allocation1 [shape = 'u32[144,128]{1,0:T(1,128)}', space=vmem, size = 0x12000, scoped, tag = 'internal scratch']
  %s0 = inlined_call_operand.hbm [shape: f32[4,2,8], index: 0, kind: input, shape index: {}]
  %s1 = inlined_call_operand.vmem [shape: f32[2,32], index: 1, kind: input, shape index: {}]
  %s2 = inlined_call_operand.hbm [shape: f32[32,128], index: 2, kind: input, shape index: {}]
  %s3 = inlined_call_operand.vmem [shape: f32[1,128], index: 3, kind: input, shape index: {}]
  %s4 = inlined_call_operand.vmem [shape: s32[2,1], index: 4, kind: input, shape index: {}]
  %s5 = inlined_call_operand.hbm [shape: f32[2,8], index: 5, kind: output, shape index: {0}]
  %s6 = inlined_call_operand.hbm [shape: f32[2,128], index: 6, kind: output, shape index: {1}]
  %7 = xla_tuple %s5, %s6
  %s8 = sld [smem:[#allocation0]]
  $region46: #{tpu_custom_call.1} parent=0
    _
  %s10 = ssub.s32 1, %s8
  %s11 = scalar_select 0, %s10, %s8
  $region1: #{tpu_custom_call.1} parent=0
    #allocation2 [shape = 'u8[4096]{0}', space=vmem, size = 0x1000, scoped, tag = 'input window, operand 0, single buffered']
    #allocation3 [shape = 's32[1]{0}', space=sflag, size = 0x4, scoped, tag = 'scoped memory for tpu_custom_call.1']
    #allocation4 [shape = 's32[1]{0}', space=sflag, size = 0x4, scoped, tag = 'scoped memory for tpu_custom_call.1']
    #allocation5 [shape = 'u8[16384]{0}', space=vmem, size = 0x4000, scoped, tag = 'input window, operand 2, single buffered']
    #allocation6 [shape = 's32[1]{0}', space=sflag, size = 0x4, scoped, tag = 'scoped memory for tpu_custom_call.1']
    #allocation7 [shape = 'u8[1024]{0}', space=vmem, size = 0x400, scoped, tag = 'output window, operand 0, single buffered']
    #allocation8 [shape = 'u8[1024]{0}', space=vmem, size = 0x400, scoped, tag = 'output window, operand 1, single buffered']
    #allocation9 [shape = 's32[1]{0}', space=sflag, size = 0x4, scoped, tag = 'scoped memory for tpu_custom_call.1']
    %12 = vsyncpa [#allocation3], 0
    %13 = vsyncpa [#allocation6], 0
    %14 = vsyncpa [#allocation4], 0
    %15 = vsyncpa [#allocation9], 0
    // Predicated region
    $region2: #{tpu_custom_call.1} parent=1 // pred_check
      _
    $region3: #{tpu_custom_call.1} parent=1 // pred_check_branch
      %17 = sbr.rel (0) target = $region5
    $region4: #{tpu_custom_call.1} parent=1 // pred_region
      %s19 = ssub.s32 128, 128
      %20 = vsyncadd [#allocation3], %s19
      %s21 = sshll.u32 [#allocation2], 4
      %s22 = int_to_ptr.vmem [resolvable:$true] %s21
      %27 = dma.hbm_to_vmem [thread:$0]  %s0, 128, %s22, [#allocation3], 32, 32, 2
    $region5: #{tpu_custom_call.1} parent=1 // pred_fallthru
      _
    // Predicated region
    $region6: #{tpu_custom_call.1} parent=1 // pred_check
      _
    $region7: #{tpu_custom_call.1} parent=1 // pred_check_branch
      %29 = sbr.rel (0) target = $region9
    $region8: #{tpu_custom_call.1} parent=1 // pred_region
      _
    $region9: #{tpu_custom_call.1} parent=1 // pred_fallthru
      _
    // Predicated region
    $region10: #{tpu_custom_call.1} parent=1 // pred_check
      _
    $region11: #{tpu_custom_call.1} parent=1 // pred_check_branch
      %31 = sbr.rel (0) target = $region13
    $region12: #{tpu_custom_call.1} parent=1 // pred_region
      %s33 = ssub.s32 512, 512
      %34 = vsyncadd [#allocation6], %s33
      %s35 = sshll.u32 [#allocation5], 4
      %s36 = int_to_ptr.vmem [resolvable:$true] %s35
      %41 = dma.hbm_to_vmem [thread:$0]  %s2, 512, %s36, [#allocation6], 128, 128, 8
    $region13: #{tpu_custom_call.1} parent=1 // pred_fallthru
      _
    // Predicated region
    $region14: #{tpu_custom_call.1} parent=1 // pred_check
      _
    $region15: #{tpu_custom_call.1} parent=1 // pred_check_branch
      %43 = sbr.rel (0) target = $region17
    $region16: #{tpu_custom_call.1} parent=1 // pred_region
      _
    $region17: #{tpu_custom_call.1} parent=1 // pred_fallthru
      _
    // Predicated region
    $region18: #{tpu_custom_call.1} parent=1 // pred_check
      _
    $region19: #{tpu_custom_call.1} parent=1 // pred_check_branch
      %45 = sbr.rel (0) target = $region21
    $region20: #{tpu_custom_call.1} parent=1 // pred_region
      _
    $region21: #{tpu_custom_call.1} parent=1 // pred_fallthru
      _
    // Predicated region
    $region22: #{tpu_custom_call.1} parent=1 // pred_check
      _
    $region23: #{tpu_custom_call.1} parent=1 // pred_check_branch
      %47 = sbr.rel (0) target = $region25
    $region24: #{tpu_custom_call.1} parent=1 // pred_region
      %48 = dma.done [#allocation3], 128
    $region25: #{tpu_custom_call.1} parent=1 // pred_fallthru
      _
    // Predicated region
    $region26: #{tpu_custom_call.1} parent=1 // pred_check
      _
    $region27: #{tpu_custom_call.1} parent=1 // pred_check_branch
      %50 = sbr.rel (0) target = $region29
    $region28: #{tpu_custom_call.1} parent=1 // pred_region
      %51 = dma.done [#allocation6], 512
    $region29: #{tpu_custom_call.1} parent=1 // pred_fallthru
      _
    %v52 = vld [vmem:[#allocation2] sm:$0x3]
    %v53 = vld [vmem:[#allocation2 + $0x2] sm:$0x3]
    %v54 = vld [vmem:[#allocation2 + $0x4] sm:$0x3]
    %v55 = vld [vmem:[#allocation2 + $0x6] sm:$0x3]
    %vm56 = vcmask 58368
    %v57 = vsel %vm56, %v52, 0.0
    %v58 = vsel %vm56, %v53, 0.0
    %v59 = vadd.f32 %v57, %v58
    %v60 = vsel %vm56, %v54, 0.0
    %v61 = vadd.f32 %v59, %v60
    %v62 = vsel %vm56, %v55, 0.0
    %v63 = vadd.f32 %v61, %v62
    %v64 = vmul.f32 %v63, 0.25
    %65 = vst.msk [vmem:[#allocation7] sm:$0x3] %vm56, %v64
    %v66 = vld [vmem:[%s1] sm:$0x3]
    %v67 = vld [vmem:[#allocation5] sm:$0xff]
    %v68 = vld [vmem:[#allocation5 + $0x8] sm:$0xff]
    %v69 = vld [vmem:[#allocation5 + $0x10] sm:$0xff]
    %v70 = vld [vmem:[#allocation5 + $0x18] sm:$0xff]
    %v71 = vld [vmem:[%s3] sm:$0x1]
    %v73 = vlaneseq
    %v74 = vshrl.u32 %v73, 7
    %v75 = vsub.s32 0, %v74
    %v76 = vrot.slane %v71, %v75
    %vm78 = vcmask 261120
    %v80 = vsel %vm78, %v66, 0
    %82 = vmatprep.subr.mxu0 0.0
    %83 = vmatpush1.msra.mxu0 0.0
    %84 = vmatprep.subr.mxu0 0.0
    %85 = vmatpush1.msra.mxu0 0.0
    %86 = vmatprep.subr.mxu0 0.0
    %87 = vmatpush1.msra.mxu0 0.0
    %88 = vmatprep.subr.mxu0 0.0
    %89 = vmatpush1.msra.mxu0 0.0
    %90 = vmatprep.subr.mxu0 0.0
    %91 = vmatpush1.msra.mxu0 0.0
    %92 = vmatprep.subr.mxu0 0.0
    %93 = vmatpush1.msra.mxu0 0.0
    %94 = vmatprep.subr.mxu0 0.0
    %95 = vmatpush1.msra.mxu0 0.0
    %96 = vmatprep.subr.mxu0 0.0
    %97 = vmatpush1.msra.mxu0 0.0
    %98 = vmatprep.subr.mxu0 0.0
    %99 = vmatpush1.msra.mxu0 0.0
    %100 = vmatprep.subr.mxu0 0.0
    %101 = vmatpush1.msra.mxu0 0.0
    %102 = vmatprep.subr.mxu0 0.0
    %103 = vmatpush1.msra.mxu0 0.0
    %104 = vmatprep.subr.mxu0 0.0
    %105 = vmatpush1.msra.mxu0 0.0
    %106 = vmatprep.subr.mxu0 0.0
    %107 = vmatpush1.msra.mxu0 %v70
    %108 = vmatprep.subr.mxu0 0.0
    %109 = vmatpush1.msra.mxu0 %v69
    %110 = vmatprep.subr.mxu0 0.0
    %111 = vmatpush1.msra.mxu0 %v68
    %112 = vmatprep.subr.mxu0 0.0
    %113 = vmatpush1.msra.mxu0 %v67
    %114 = vmatprep.subr.mxu0 0.0
    %115 = vmatpush2.msra.mxu0 0.0
    %116 = vmatprep.subr.mxu0 0.0
    %117 = vmatpush2.msra.mxu0 0.0
    %118 = vmatprep.subr.mxu0 0.0
    %119 = vmatpush2.msra.mxu0 0.0
    %120 = vmatprep.subr.mxu0 0.0
    %121 = vmatpush2.msra.mxu0 0.0
    %122 = vmatprep.subr.mxu0 0.0
    %123 = vmatpush2.msra.mxu0 0.0
    %124 = vmatprep.subr.mxu0 0.0
    %125 = vmatpush2.msra.mxu0 0.0
    %126 = vmatprep.subr.mxu0 0.0
    %127 = vmatpush2.msra.mxu0 0.0
    %128 = vmatprep.subr.mxu0 0.0
    %129 = vmatpush2.msra.mxu0 0.0
    %130 = vmatprep.subr.mxu0 0.0
    %131 = vmatpush2.msra.mxu0 0.0
    %132 = vmatprep.subr.mxu0 0.0
    %133 = vmatpush2.msra.mxu0 0.0
    %134 = vmatprep.subr.mxu0 0.0
    %135 = vmatpush2.msra.mxu0 0.0
    %136 = vmatprep.subr.mxu0 0.0
    %137 = vmatpush2.msra.mxu0 0.0
    %138 = vmatprep.subr.mxu0 0.0
    %139 = vmatpush2.msra.mxu0 0.0
    %140 = vmatprep.subr.mxu0 0.0
    %141 = vmatpush2.msra.mxu0 0.0
    %142 = vmatprep.subr.mxu0 0.0
    %143 = vmatpush2.msra.mxu0 0.0
    %144 = vmatprep.subr.mxu0 0.0
    %145 = vmatpush2.msra.mxu0 0.0
    %146 = vmatprep.mubr.f32.mxu0 0.0
    %147 = vmatmul.mubr.f32.gmra.mxu0 %v80
    %v148 = vpop.f32.mrf.mxu0
    %v149 = vadd.f32 %v76, %v148
    %v150 = vpop.f32.mrf.mxu0
    %151 = vdwg.mxu0
    %v152 = vlaneseq
    %v153 = vand.u32 %v152, 127
    %vm154 = vcmp.lt.s32.totalorder %v153, 4
    %v155 = vsel %vm154, %v149, -1e+30
    %vm156 = vcmask 1041408
    %v157 = vsel %vm156, %v155, -inf
    %158 = vmax.xlane.f32.xlu0 %v157
    %v159 = vpop.xlane.xlu0 %158
    %v160 = vsub.f32 %v155, %v159
    %v161 = vmul.f32 %v160, 1.442695
    %v162 = vpow.pop %v161
    %v163 = vsel %vm156, %v162, 0.0
    %164 = vadd.xlane.f32.xlu0 %v163
    %v165 = vpop.xlane.xlu0 %164
    %v166 = vlog2.pop %v165
    %v167 = vmul.f32 %v166, 0.6931472
    %v168 = vadd.f32 %v159, %v167
    %v169 = vld [vmem:[%s4] sm:$0x3]
    %170 = vset.pattern.permute.xlu0 0
    %171 = vperm.xlu0 %170, %v169
    %v172 = vpop.permute.xlu0 %171
    %vm173 = vcmp.eq.s32.totalorder %v153, %v172
    %v174 = vsel %vm173, 1, 0
    %v175 = vcvt.s32.f32 %v174
    %v176 = vmul.f32 %v175, %v149
    %v177 = vsel %vm156, %v176, 0.0
    %178 = vadd.xlane.f32.xlu0 %v177
    %v179 = vpop.xlane.xlu0 %178
    %v180 = vsub.f32 %v168, %v179
    %vm181 = vcmp.eq.s32.totalorder %v153, 4
    %v182 = vsel %vm181, %v180, %v149
    %183 = vst [vmem:[#allocation8] sm:$0x3] %v182
    // Predicated region
    $region30: #{tpu_custom_call.1} parent=1 // pred_check
      _
    $region31: #{tpu_custom_call.1} parent=1 // pred_check_branch
      %185 = sbr.rel (0) target = $region33
    $region32: #{tpu_custom_call.1} parent=1 // pred_region
      %s187 = ssub.s32 32, 32
      %188 = vsyncadd [#allocation4], %s187
      %s190 = sshll.u32 [#allocation7], 4
      %s191 = int_to_ptr.vmem [resolvable:$true] %s190
      %193 = dma.vmem_to_hbm [thread:$0]  %s191, 32, %s5, [#allocation4]
    $region33: #{tpu_custom_call.1} parent=1 // pred_fallthru
      _
    // Predicated region
    $region34: #{tpu_custom_call.1} parent=1 // pred_check
      _
    $region35: #{tpu_custom_call.1} parent=1 // pred_check_branch
      %195 = sbr.rel (0) target = $region37
    $region36: #{tpu_custom_call.1} parent=1 // pred_region
      %s197 = ssub.s32 32, 32
      %198 = vsyncadd [#allocation9], %s197
      %s200 = sshll.u32 [#allocation8], 4
      %s201 = int_to_ptr.vmem [resolvable:$true] %s200
      %203 = dma.vmem_to_hbm [thread:$0]  %s201, 32, %s6, [#allocation9]
    $region37: #{tpu_custom_call.1} parent=1 // pred_fallthru
      _
    // Predicated region
    $region38: #{tpu_custom_call.1} parent=1 // pred_check
      _
    $region39: #{tpu_custom_call.1} parent=1 // pred_check_branch
      %205 = sbr.rel (0) target = $region41
    $region40: #{tpu_custom_call.1} parent=1 // pred_region
      %206 = dma.done [#allocation4], 32
    $region41: #{tpu_custom_call.1} parent=1 // pred_fallthru
      _
    // Predicated region
    $region42: #{tpu_custom_call.1} parent=1 // pred_check
      _
    $region43: #{tpu_custom_call.1} parent=1 // pred_check_branch
      %208 = sbr.rel (0) target = $region45
    $region44: #{tpu_custom_call.1} parent=1 // pred_region
      %209 = dma.done [#allocation9], 32
    $region45: #{tpu_custom_call.1} parent=1 // pred_fallthru
      _
    %210 = vsyncpa [#allocation3], 1
    %211 = vsyncpa [#allocation6], 1
    %212 = vsyncpa [#allocation4], 1
    %213 = vsyncpa [#allocation9], 1

</llo_original>
